<compile_context>
chip_gen: v5e
topology: v5e:2x2
jax: 0.10.0
libtpu: 0.0.40
codegen_flags: <defaults>
</compile_context>

<pallas_src>
import functools

import numpy as np
import jax
import jax.numpy as jnp
from jax.experimental import pallas as pl
from jax.experimental.pallas import tpu as pltpu

EPS = 1e-5
LANE = 128
MAX_TILE_M = 1024   # pixels per grid step (lane axis); keeps vreg pressure low


def _round_up(x, m):
    return (x + m - 1) // m * m


# ---------------------------------------------------------------------------
# Static geometry of a 1x1 / stride-2 / pad-p transposed conv along one dim.
# ---------------------------------------------------------------------------
def _dim_geom(length, pad):
    """Returns (out_length, a, b): input index i survives iff a <= i < b and
    lands at output position 2*i - pad; every other output position is zero."""
    out_length = 2 * length - 1 - 2 * pad
    a = (pad + 1) // 2
    b = length - (pad + 1) // 2
    return out_length, a, b


def _stage2_keep(a1, b1, pad1, a2, b2):
    """Stage-1 data positions (j = 2*i - pad1, i in [a1, b1)) that fall inside
    the stage-2 crop window [a2, b2).  Returns (a12, b12, q): the surviving
    original-index range and the offset q of the first kept data position
    inside the stage-2 window (kept data positions sit at q + 2*t)."""
    a12 = max(a1, (a2 + pad1 + 1) // 2)
    b12 = min(b1, (b2 - 1 + pad1) // 2 + 1)
    q = 2 * a12 - pad1 - a2
    return a12, b12, q


# ---------------------------------------------------------------------------
# In-kernel helpers (all VPU; channel counts are tiny so the MXU is skipped).
# ---------------------------------------------------------------------------
def _col_mask(tile_m, m_valid):
    """(1, tile_m) f32 mask of lanes holding real pixels (not slab padding)."""
    col = jax.lax.broadcasted_iota(jnp.int32, (1, tile_m), 1)
    col = col + pl.program_id(0) * tile_m
    return (col < m_valid).astype(jnp.float32)


def _matvec(x, wt):
    """x: (c_in, tile_m), wt: (c_out, c_in) -> (c_out, tile_m) via unrolled
    broadcast-FMAs: y[co, :] = sum_ci wt[co, ci] * x[ci, :]."""
    c_in = x.shape[0]
    y = x[0:1, :] * wt[:, 0:1]
    for ci in range(1, c_in):
        y = y + x[ci:ci + 1, :] * wt[:, ci:ci + 1]
    return y


def _affine_relu(y, aff):
    """Per-channel y * scale + shift then ReLU.  aff: (c, 2) = [scale, shift]."""
    return jnp.maximum(y * aff[:, 0:1] + aff[:, 1:2], 0.0)


# ---------------------------------------------------------------------------
# Kernels.
# ---------------------------------------------------------------------------
def _stats1_kernel(m_valid, x_ref, w1t_ref, sum_ref, ssq_ref):
    """Pass 1: per-channel sum / sum^2 of y1 = conv1(x) over the data pixels."""
    tile_m = x_ref.shape[1]
    y = _matvec(x_ref[...], w1t_ref[...]) * _col_mask(tile_m, m_valid)

    @pl.when(pl.program_id(0) == 0)
    def _init():
        sum_ref[...] = jnp.zeros_like(sum_ref)
        ssq_ref[...] = jnp.zeros_like(ssq_ref)

    sum_ref[...] += jnp.sum(y, axis=1, keepdims=True)
    ssq_ref[...] += jnp.sum(y * y, axis=1, keepdims=True)


def _stats2_kernel(m_valid, x_ref, w1t_ref, aff1_ref, w2t_ref, sum_ref, ssq_ref):
    """Pass 2: recompute stage-1 (cheap), apply BN1+ReLU, contract with w2 and
    accumulate stage-2 per-channel sum / sum^2 over the kept data pixels."""
    tile_m = x_ref.shape[1]
    r1 = _affine_relu(_matvec(x_ref[...], w1t_ref[...]), aff1_ref[...])
    y2 = _matvec(r1, w2t_ref[...]) * _col_mask(tile_m, m_valid)

    @pl.when(pl.program_id(0) == 0)
    def _init():
        sum_ref[...] = jnp.zeros_like(sum_ref)
        ssq_ref[...] = jnp.zeros_like(ssq_ref)

    sum_ref[...] += jnp.sum(y2, axis=1, keepdims=True)
    ssq_ref[...] += jnp.sum(y2 * y2, axis=1, keepdims=True)


def _finalize_kernel(x_ref, w1t_ref, aff1_ref, w2t_ref, aff2_ref, out_ref):
    """Pass 3: full fused chain on the data pixels; lane-dense (C2, tile) store."""
    r1 = _affine_relu(_matvec(x_ref[...], w1t_ref[...]), aff1_ref[...])
    out_ref[...] = _affine_relu(_matvec(r1, w2t_ref[...]), aff2_ref[...])


# ---------------------------------------------------------------------------
# pallas_call wrappers.
# ---------------------------------------------------------------------------
def _compiler_params(parallel):
    return pltpu.CompilerParams(
        dimension_semantics=("parallel",) if parallel else ("arbitrary",),
        vmem_limit_bytes=32 * 1024 * 1024)


def _x_spec(c, tile_m):
    return pl.BlockSpec((c, tile_m), lambda t: (0, t))


def _const_spec(arr):
    nd = arr.ndim
    return pl.BlockSpec(arr.shape, lambda t: (0,) * nd)


def _acc_spec(c):
    return pl.BlockSpec((c, 1), lambda t: (0, 0))


def _to_slab(x_crop, tile_m):
    """(N, C, h, w) -> lane-dense (C, M_padded) slab (pixels on the lane axis)."""
    n, c, h, w = x_crop.shape
    m = n * h * w
    slab = jnp.transpose(x_crop, (1, 0, 2, 3)).reshape(c, m)
    m_pad = _round_up(m, tile_m)
    if m_pad != m:
        slab = jnp.pad(slab, ((0, 0), (0, m_pad - m)))
    return slab, m


def _run_stats1(x_crop, w1t, tile_m):
    slab, m = _to_slab(x_crop, tile_m)
    c1 = slab.shape[0]
    s, ss = pl.pallas_call(
        functools.partial(_stats1_kernel, m),
        out_shape=(jax.ShapeDtypeStruct((c1, 1), jnp.float32),
                   jax.ShapeDtypeStruct((c1, 1), jnp.float32)),
        grid=(slab.shape[1] // tile_m,),
        in_specs=[_x_spec(c1, tile_m), _const_spec(w1t)],
        out_specs=(_acc_spec(c1), _acc_spec(c1)),
        compiler_params=_compiler_params(parallel=False),
    )(slab, w1t)
    return s[:, 0], ss[:, 0]


def _run_stats2(x_crop, w1t, aff1, w2t, tile_m):
    slab, m = _to_slab(x_crop, tile_m)
    c1 = slab.shape[0]
    c2 = w2t.shape[0]
    s, ss = pl.pallas_call(
        functools.partial(_stats2_kernel, m),
        out_shape=(jax.ShapeDtypeStruct((c2, 1), jnp.float32),
                   jax.ShapeDtypeStruct((c2, 1), jnp.float32)),
        grid=(slab.shape[1] // tile_m,),
        in_specs=[_x_spec(c1, tile_m), _const_spec(w1t), _const_spec(aff1),
                  _const_spec(w2t)],
        out_specs=(_acc_spec(c2), _acc_spec(c2)),
        compiler_params=_compiler_params(parallel=False),
    )(slab, w1t, aff1, w2t)
    return s[:, 0], ss[:, 0]


def _run_finalize(x_crop, w1t, aff1, w2t, aff2, tile_m):
    slab, m = _to_slab(x_crop, tile_m)
    n, _, h, w = x_crop.shape
    c1 = slab.shape[0]
    c2 = w2t.shape[0]
    out = pl.pallas_call(
        _finalize_kernel,
        out_shape=jax.ShapeDtypeStruct((c2, slab.shape[1]), jnp.float32),
        grid=(slab.shape[1] // tile_m,),
        in_specs=[_x_spec(c1, tile_m), _const_spec(w1t), _const_spec(aff1),
                  _const_spec(w2t), _const_spec(aff2)],
        out_specs=pl.BlockSpec((c2, tile_m), lambda t: (0, t)),
        compiler_params=_compiler_params(parallel=True),
    )(slab, w1t, aff1, w2t, aff2)
    out = out[:, :m].reshape(c2, n, h, w)
    return jnp.transpose(out, (1, 0, 2, 3))          # (N, C2, h, w) data block


# ---------------------------------------------------------------------------
# Scatter-free strided placement (interleaving reshape + border concats only).
# ---------------------------------------------------------------------------
def _place_strided2(x, fill, r0, c0, h_out, w_out):
    """(N,C,hx,wx) -> (N,C,h_out,w_out): `fill` everywhere, x[a,b] at
    (r0 + 2a, c0 + 2b).  No scatter, no full-tensor fill-then-overwrite."""
    n, c, hx, wx = x.shape
    f6 = fill.reshape(1, c, 1, 1, 1, 1)
    xr = x.reshape(n, c, hx, 1, wx, 1)
    row = jnp.concatenate(
        [xr, jnp.broadcast_to(f6, (n, c, hx, 1, wx, 1))], axis=5)
    blk = jnp.concatenate(
        [row, jnp.broadcast_to(f6, (n, c, hx, 1, wx, 2))], axis=3)
    blk = blk.reshape(n, c, 2 * hx, 2 * wx)
    blk = blk[:, :, :min(2 * hx, h_out - r0), :min(2 * wx, w_out - c0)]
    bh, bw = blk.shape[2], blk.shape[3]
    f4 = fill.reshape(1, c, 1, 1)
    mid = jnp.concatenate(
        [jnp.broadcast_to(f4, (n, c, bh, c0)), blk,
         jnp.broadcast_to(f4, (n, c, bh, w_out - c0 - bw))], axis=3)
    return jnp.concatenate(
        [jnp.broadcast_to(f4, (n, c, r0, w_out)), mid,
         jnp.broadcast_to(f4, (n, c, h_out - r0 - bh, w_out))], axis=2)


# ---------------------------------------------------------------------------
# Forward pass.
# ---------------------------------------------------------------------------
def trans_decoupling_block2_forward(x, params, pooling1, pooling2,
                                    max_tile_m=MAX_TILE_M):
    w1, g1, b1, w2, g2, b2 = params
    n, c1, h, w = x.shape
    c2 = w2.shape[1]

    # ---- static geometry of the two 1x1 / stride-2 transposed convs --------
    h1, a1r, b1r = _dim_geom(h, pooling1)
    w1l, a1c, b1c = _dim_geom(w, pooling1)
    h2, a2r, b2r = _dim_geom(h1, pooling2)
    w2l, a2c, b2c = _dim_geom(w1l, pooling2)
    a12r, b12r, qr = _stage2_keep(a1r, b1r, pooling1, a2r, b2r)
    a12c, b12c, qc = _stage2_keep(a1c, b1c, pooling1, a2c, b2c)

    hs1, ws1 = b1r - a1r, b1c - a1c          # stage-1 data rows / cols
    hk, wk = b2r - a2r, b2c - a2c            # stage-1 positions kept by stage 2
    hs2, ws2 = b12r - a12r, b12c - a12c      # data rows / cols kept by stage 2
    assert min(hs1, ws1, hk, wk, hs2, ws2) > 0, "degenerate tconv geometry"

    m1 = n * hs1 * ws1
    m2 = n * hs2 * ws2
    tile1 = min(max_tile_m, _round_up(m1, LANE))
    tile2 = min(max_tile_m, _round_up(m2, LANE))

    w1t = jnp.transpose(w1)      # (out, in) for in-kernel column broadcasts
    w2t = jnp.transpose(w2)

    # ---- pass 1: stage-1 statistics over its surviving data pixels ---------
    x1 = x[:, :, a1r:b1r, a1c:b1c]                       # contiguous slice
    s1, ss1 = _run_stats1(x1, w1t, tile1)
    total1 = float(n * h1 * w1l)
    mean1 = s1 / total1
    var1 = jnp.maximum(ss1 / total1 - mean1 * mean1, 0.0)   # clamp -> no NaN
    scale1 = g1 * jax.lax.rsqrt(var1 + EPS)
    shift1 = b1 - mean1 * scale1
    aff1 = jnp.stack([scale1, shift1], axis=1)           # (c1, 2)
    z1 = jnp.maximum(shift1, 0.0)        # BN1+ReLU value of every stuffed zero

    # ---- pass 2: stage-2 statistics (data pixels + analytic constants) -----
    x2 = x[:, :, a12r:b12r, a12c:b12c]                   # contiguous sub-slice
    s2d, ss2d = _run_stats2(x2, w1t, aff1, w2t, tile2)
    y2c = z1 @ w2                                        # constant row after conv2
    n_const = float(n * (hk * wk - hs2 * ws2))
    total2 = float(n * h2 * w2l)
    s2 = s2d + n_const * y2c
    ss2 = ss2d + n_const * y2c * y2c
    mean2 = s2 / total2
    var2 = jnp.maximum(ss2 / total2 - mean2 * mean2, 0.0)
    scale2 = g2 * jax.lax.rsqrt(var2 + EPS)
    shift2 = b2 - mean2 * scale2
    aff2 = jnp.stack([scale2, shift2], axis=1)           # (c2, 2)
    const_a = jnp.maximum(shift2, 0.0)                 # stage-2 stuffed zeros
    const_b = jnp.maximum(y2c * scale2 + shift2, 0.0)  # constant-origin pixels

    # ---- pass 3: normalized data pixels (parallel over tiles) --------------
    data = _run_finalize(x2, w1t, aff1, w2t, aff2, tile2)   # (n, c2, hs2, ws2)

    # ---- scatter-free assembly of the 4x-upsampled output ------------------
    kept = _place_strided2(data, const_b, qr, qc, hk, wk)
    return _place_strided2(kept, const_a, 2 * a2r - pooling2,
                           2 * a2c - pooling2, h2, w2l)


# ---------------------------------------------------------------------------
# Pure-JAX reference (explicit zero-scatter + full-tensor BatchNorm).
# ---------------------------------------------------------------------------
def _ref_forward(x_nchw, params, p1, p2):
    w1, g1, b1, w2, g2, b2 = params

    def tconv(x, wm, p):
        n, _, hh, ww = x.shape
        h_out, ar, br = _dim_geom(hh, p)
        w_out, ac, bc = _dim_geom(ww, p)
        y = jnp.einsum('nchw,cd->ndhw', x, wm)
        r_in = np.arange(ar, br); r_out = 2 * r_in - p
        c_in = np.arange(ac, bc); c_out = 2 * c_in - p
        out = jnp.zeros((n, wm.shape[1], h_out, w_out), jnp.float32)
        return out.at[:, :, r_out[:, None], c_out[None, :]].set(
            y[:, :, r_in[:, None], c_in[None, :]])

    def bn_relu(x, g, b):
        mean = x.mean(axis=(0, 2, 3), keepdims=True)
        var = x.var(axis=(0, 2, 3), keepdims=True)        # biased (torch BN)
        xn = (x - mean) * jax.lax.rsqrt(var + EPS)
        return jnp.maximum(
            xn * g.reshape(1, -1, 1, 1) + b.reshape(1, -1, 1, 1), 0.0)

    o = bn_relu(tconv(x_nchw, w1, p1), g1, b1)
    o = bn_relu(tconv(o, w2, p2), g2, b2)
    return o


if __name__ == "__main__":
    in_size, out_size = 4, 8
    pooling1, pooling2 = 0, 1
    N, H, W = 2, 8, 8

    key = jax.random.PRNGKey(0)
    k = jax.random.split(key, 7)
    # ConvTranspose2d weight (in, out, 1, 1) squeezed to an (in, out) matrix.
    w1 = 0.2 * jax.random.normal(k[0], (in_size, in_size), jnp.float32)
    w2 = 0.2 * jax.random.normal(k[1], (in_size, out_size), jnp.float32)
    g1 = 1.0 + 0.1 * jax.random.normal(k[2], (in_size,), jnp.float32)
    b1 = 0.1 * jax.random.normal(k[3], (in_size,), jnp.float32)
    g2 = 1.0 + 0.1 * jax.random.normal(k[4], (out_size,), jnp.float32)
    b2 = 0.1 * jax.random.normal(k[5], (out_size,), jnp.float32)
    params = (w1, g1, b1, w2, g2, b2)
    x = jax.random.normal(k[6], (N, in_size, H, W), jnp.float32)

    fwd = jax.jit(functools.partial(trans_decoupling_block2_forward,
                                    pooling1=pooling1, pooling2=pooling2))
    out = jax.block_until_ready(fwd(x, params))
    ref = jax.block_until_ready(_ref_forward(x, params, pooling1, pooling2))

    assert out.shape == ref.shape, (out.shape, ref.shape)
    np.testing.assert_allclose(np.asarray(out), np.asarray(ref),
                               rtol=1e-4, atol=1e-4)
    print("KERNEL_OK")
</pallas_src>

<mosaic_0001>
module attributes {stable_mosaic.version = 11 : i64} {
  func.func @_stats1_kernel(%arg0: i32, %arg1: memref<4x128xf32, #tpu.memory_space<vmem>>, %arg2: memref<4x4xf32, #tpu.memory_space<vmem>>, %arg3: memref<4x1xf32, #tpu.memory_space<vmem>>, %arg4: memref<4x1xf32, #tpu.memory_space<vmem>>) attributes {dimension_semantics = [#tpu.dimension_semantics<arbitrary>], iteration_bounds = array<i64: 1>, scalar_prefetch = 0 : i64, scratch_operands = 0 : i64, tpu.core_type = #tpu.core_type<tc>, window_params = [{transform_indices = @transform_0, window_bounds = array<i64: 4, 128>}, {pipeline_mode = #tpu.pipeline_mode<synchronous>, transform_indices = @transform_1, window_bounds = array<i64: 4, 4>}, {pipeline_mode = #tpu.pipeline_mode<synchronous>, transform_indices = @transform_2, window_bounds = array<i64: 4, 1>}, {pipeline_mode = #tpu.pipeline_mode<synchronous>, transform_indices = @transform_3, window_bounds = array<i64: 4, 1>}]} {
    %c0 = arith.constant 0 : index
    %c0_0 = arith.constant 0 : index
    %0 = vector.load %arg1[%c0, %c0_0] : memref<4x128xf32, #tpu.memory_space<vmem>>, vector<4x128xf32>
    %c0_1 = arith.constant 0 : index
    %c0_2 = arith.constant 0 : index
    %1 = vector.load %arg2[%c0_1, %c0_2] : memref<4x4xf32, #tpu.memory_space<vmem>>, vector<4x4xf32>
    %2 = vector.extract_strided_slice %0 {offsets = [0, 0], sizes = [1, 128], strides = [1, 1]} : vector<4x128xf32> to vector<1x128xf32>
    %3 = vector.extract_strided_slice %1 {offsets = [0, 0], sizes = [4, 1], strides = [1, 1]} : vector<4x4xf32> to vector<4x1xf32>
    %4 = vector.broadcast %2 : vector<1x128xf32> to vector<4x128xf32>
    %5 = vector.broadcast %3 : vector<4x1xf32> to vector<4x128xf32>
    %6 = arith.mulf %4, %5 : vector<4x128xf32>
    %7 = vector.extract_strided_slice %0 {offsets = [1, 0], sizes = [1, 128], strides = [1, 1]} : vector<4x128xf32> to vector<1x128xf32>
    %8 = vector.extract_strided_slice %1 {offsets = [0, 1], sizes = [4, 1], strides = [1, 1]} : vector<4x4xf32> to vector<4x1xf32>
    %9 = vector.broadcast %7 : vector<1x128xf32> to vector<4x128xf32>
    %10 = vector.broadcast %8 : vector<4x1xf32> to vector<4x128xf32>
    %11 = arith.mulf %9, %10 : vector<4x128xf32>
    %12 = arith.addf %6, %11 : vector<4x128xf32>
    %13 = vector.extract_strided_slice %0 {offsets = [2, 0], sizes = [1, 128], strides = [1, 1]} : vector<4x128xf32> to vector<1x128xf32>
    %14 = vector.extract_strided_slice %1 {offsets = [0, 2], sizes = [4, 1], strides = [1, 1]} : vector<4x4xf32> to vector<4x1xf32>
    %15 = vector.broadcast %13 : vector<1x128xf32> to vector<4x128xf32>
    %16 = vector.broadcast %14 : vector<4x1xf32> to vector<4x128xf32>
    %17 = arith.mulf %15, %16 : vector<4x128xf32>
    %18 = arith.addf %12, %17 : vector<4x128xf32>
    %19 = vector.extract_strided_slice %0 {offsets = [3, 0], sizes = [1, 128], strides = [1, 1]} : vector<4x128xf32> to vector<1x128xf32>
    %20 = vector.extract_strided_slice %1 {offsets = [0, 3], sizes = [4, 1], strides = [1, 1]} : vector<4x4xf32> to vector<4x1xf32>
    %21 = vector.broadcast %19 : vector<1x128xf32> to vector<4x128xf32>
    %22 = vector.broadcast %20 : vector<4x1xf32> to vector<4x128xf32>
    %23 = arith.mulf %21, %22 : vector<4x128xf32>
    %24 = arith.addf %18, %23 : vector<4x128xf32>
    %25 = tpu.iota {dimensions = array<i32: 1>} : vector<1x128xi32>
    %c128_i32 = arith.constant 128 : i32
    %26 = arith.muli %arg0, %c128_i32 : i32
    %27 = vector.broadcast %26 : i32 to vector<1x128xi32>
    %28 = arith.addi %25, %27 : vector<1x128xi32>
    %c128_i32_3 = arith.constant 128 : i32
    %29 = vector.broadcast %c128_i32_3 : i32 to vector<1x128xi32>
    %30 = arith.cmpi slt, %28, %29 : vector<1x128xi32>
    %31 = arith.extui %30 : vector<1x128xi1> to vector<1x128xi32>
    %32 = arith.sitofp %31 : vector<1x128xi32> to vector<1x128xf32>
    %33 = vector.broadcast %32 : vector<1x128xf32> to vector<4x128xf32>
    %34 = arith.mulf %24, %33 : vector<4x128xf32>
    %c0_i32 = arith.constant 0 : i32
    %35 = arith.cmpi eq, %arg0, %c0_i32 : i32
    %36 = arith.extui %35 : i1 to i32
    %c0_i32_4 = arith.constant 0 : i32
    %37 = arith.cmpi ne, %36, %c0_i32_4 : i32
    scf.if %37 {
      %cst_14 = arith.constant 0.000000e+00 : f32
      %49 = vector.broadcast %cst_14 : f32 to vector<4x1xf32>
      %c0_15 = arith.constant 0 : index
      %c0_16 = arith.constant 0 : index
      %50 = vector.load %arg3[%c0_15, %c0_16] : memref<4x1xf32, #tpu.memory_space<vmem>>, vector<4x1xf32>
      tpu.vector_store %arg3[%c0_15, %c0_16], %49 {strides = array<i32>} : memref<4x1xf32, #tpu.memory_space<vmem>>, vector<4x1xf32>,
      %cst_17 = arith.constant 0.000000e+00 : f32
      %51 = vector.broadcast %cst_17 : f32 to vector<4x1xf32>
      %c0_18 = arith.constant 0 : index
      %c0_19 = arith.constant 0 : index
      %52 = vector.load %arg4[%c0_18, %c0_19] : memref<4x1xf32, #tpu.memory_space<vmem>>, vector<4x1xf32>
      tpu.vector_store %arg4[%c0_18, %c0_19], %51 {strides = array<i32>} : memref<4x1xf32, #tpu.memory_space<vmem>>, vector<4x1xf32>,
    } else {
    }
    %c0_5 = arith.constant 0 : index
    %c0_6 = arith.constant 0 : index
    %38 = vector.load %arg3[%c0_5, %c0_6] : memref<4x1xf32, #tpu.memory_space<vmem>>, vector<4x1xf32>
    %cst = arith.constant dense<0.000000e+00> : vector<4xf32>
    %39 = vector.multi_reduction <add>, %34, %cst [1] : vector<4x128xf32> to vector<4xf32>
    %40 = vector.shape_cast %39 : vector<4xf32> to vector<4x1xf32>
    %41 = arith.addf %38, %40 : vector<4x1xf32>
    %c0_7 = arith.constant 0 : index
    %c0_8 = arith.constant 0 : index
    %42 = vector.load %arg3[%c0_7, %c0_8] : memref<4x1xf32, #tpu.memory_space<vmem>>, vector<4x1xf32>
    tpu.vector_store %arg3[%c0_7, %c0_8], %41 {strides = array<i32>} : memref<4x1xf32, #tpu.memory_space<vmem>>, vector<4x1xf32>,
    %c0_9 = arith.constant 0 : index
    %c0_10 = arith.constant 0 : index
    %43 = vector.load %arg4[%c0_9, %c0_10] : memref<4x1xf32, #tpu.memory_space<vmem>>, vector<4x1xf32>
    %44 = arith.mulf %34, %34 : vector<4x128xf32>
    %cst_11 = arith.constant dense<0.000000e+00> : vector<4xf32>
    %45 = vector.multi_reduction <add>, %44, %cst_11 [1] : vector<4x128xf32> to vector<4xf32>
    %46 = vector.shape_cast %45 : vector<4xf32> to vector<4x1xf32>
    %47 = arith.addf %43, %46 : vector<4x1xf32>
    %c0_12 = arith.constant 0 : index
    %c0_13 = arith.constant 0 : index
    %48 = vector.load %arg4[%c0_12, %c0_13] : memref<4x1xf32, #tpu.memory_space<vmem>>, vector<4x1xf32>
    tpu.vector_store %arg4[%c0_12, %c0_13], %47 {strides = array<i32>} : memref<4x1xf32, #tpu.memory_space<vmem>>, vector<4x1xf32>,
    return
  }
  func.func @transform_0(%arg0: i32) -> (i32, i32) {
    %c0_i32 = arith.constant 0 : i32
    %c0_i32_0 = arith.constant 0 : i32
    return %c0_i32, %arg0 : i32, i32
  }
  func.func @transform_1(%arg0: i32) -> (i32, i32) {
    %c0_i32 = arith.constant 0 : i32
    %c0_i32_0 = arith.constant 0 : i32
    %c0_i32_1 = arith.constant 0 : i32
    return %c0_i32, %c0_i32_0 : i32, i32
  }
  func.func @transform_2(%arg0: i32) -> (i32, i32) {
    %c0_i32 = arith.constant 0 : i32
    %c0_i32_0 = arith.constant 0 : i32
    %c0_i32_1 = arith.constant 0 : i32
    return %c0_i32, %c0_i32_0 : i32, i32
  }
  func.func @transform_3(%arg0: i32) -> (i32, i32) {
    %c0_i32 = arith.constant 0 : i32
    %c0_i32_0 = arith.constant 0 : i32
    %c0_i32_1 = arith.constant 0 : i32
    return %c0_i32, %c0_i32_0 : i32, i32
  }
}

module attributes {stable_mosaic.version = 11 : i64} {
  func.func @_stats2_kernel(%arg0: i32, %arg1: memref<4x128xf32, #tpu.memory_space<vmem>>, %arg2: memref<4x4xf32, #tpu.memory_space<vmem>>, %arg3: memref<4x2xf32, #tpu.memory_space<vmem>>, %arg4: memref<8x4xf32, #tpu.memory_space<vmem>>, %arg5: memref<8x1xf32, #tpu.memory_space<vmem>>, %arg6: memref<8x1xf32, #tpu.memory_space<vmem>>) attributes {dimension_semantics = [#tpu.dimension_semantics<arbitrary>], iteration_bounds = array<i64: 1>, scalar_prefetch = 0 : i64, scratch_operands = 0 : i64, tpu.core_type = #tpu.core_type<tc>, window_params = [{transform_indices = @transform_0, window_bounds = array<i64: 4, 128>}, {pipeline_mode = #tpu.pipeline_mode<synchronous>, transform_indices = @transform_1, window_bounds = array<i64: 4, 4>}, {pipeline_mode = #tpu.pipeline_mode<synchronous>, transform_indices = @transform_2, window_bounds = array<i64: 4, 2>}, {pipeline_mode = #tpu.pipeline_mode<synchronous>, transform_indices = @transform_3, window_bounds = array<i64: 8, 4>}, {pipeline_mode = #tpu.pipeline_mode<synchronous>, transform_indices = @transform_4, window_bounds = array<i64: 8, 1>}, {pipeline_mode = #tpu.pipeline_mode<synchronous>, transform_indices = @transform_5, window_bounds = array<i64: 8, 1>}]} {
    %c0 = arith.constant 0 : index
    %c0_0 = arith.constant 0 : index
    %0 = vector.load %arg1[%c0, %c0_0] : memref<4x128xf32, #tpu.memory_space<vmem>>, vector<4x128xf32>
    %c0_1 = arith.constant 0 : index
    %c0_2 = arith.constant 0 : index
    %1 = vector.load %arg2[%c0_1, %c0_2] : memref<4x4xf32, #tpu.memory_space<vmem>>, vector<4x4xf32>
    %2 = vector.extract_strided_slice %0 {offsets = [0, 0], sizes = [1, 128], strides = [1, 1]} : vector<4x128xf32> to vector<1x128xf32>
    %3 = vector.extract_strided_slice %1 {offsets = [0, 0], sizes = [4, 1], strides = [1, 1]} : vector<4x4xf32> to vector<4x1xf32>
    %4 = vector.broadcast %2 : vector<1x128xf32> to vector<4x128xf32>
    %5 = vector.broadcast %3 : vector<4x1xf32> to vector<4x128xf32>
    %6 = arith.mulf %4, %5 : vector<4x128xf32>
    %7 = vector.extract_strided_slice %0 {offsets = [1, 0], sizes = [1, 128], strides = [1, 1]} : vector<4x128xf32> to vector<1x128xf32>
    %8 = vector.extract_strided_slice %1 {offsets = [0, 1], sizes = [4, 1], strides = [1, 1]} : vector<4x4xf32> to vector<4x1xf32>
    %9 = vector.broadcast %7 : vector<1x128xf32> to vector<4x128xf32>
    %10 = vector.broadcast %8 : vector<4x1xf32> to vector<4x128xf32>
    %11 = arith.mulf %9, %10 : vector<4x128xf32>
    %12 = arith.addf %6, %11 : vector<4x128xf32>
    %13 = vector.extract_strided_slice %0 {offsets = [2, 0], sizes = [1, 128], strides = [1, 1]} : vector<4x128xf32> to vector<1x128xf32>
    %14 = vector.extract_strided_slice %1 {offsets = [0, 2], sizes = [4, 1], strides = [1, 1]} : vector<4x4xf32> to vector<4x1xf32>
    %15 = vector.broadcast %13 : vector<1x128xf32> to vector<4x128xf32>
    %16 = vector.broadcast %14 : vector<4x1xf32> to vector<4x128xf32>
    %17 = arith.mulf %15, %16 : vector<4x128xf32>
    %18 = arith.addf %12, %17 : vector<4x128xf32>
    %19 = vector.extract_strided_slice %0 {offsets = [3, 0], sizes = [1, 128], strides = [1, 1]} : vector<4x128xf32> to vector<1x128xf32>
    %20 = vector.extract_strided_slice %1 {offsets = [0, 3], sizes = [4, 1], strides = [1, 1]} : vector<4x4xf32> to vector<4x1xf32>
    %21 = vector.broadcast %19 : vector<1x128xf32> to vector<4x128xf32>
    %22 = vector.broadcast %20 : vector<4x1xf32> to vector<4x128xf32>
    %23 = arith.mulf %21, %22 : vector<4x128xf32>
    %24 = arith.addf %18, %23 : vector<4x128xf32>
    %c0_3 = arith.constant 0 : index
    %c0_4 = arith.constant 0 : index
    %25 = vector.load %arg3[%c0_3, %c0_4] : memref<4x2xf32, #tpu.memory_space<vmem>>, vector<4x2xf32>
    %26 = vector.extract_strided_slice %25 {offsets = [0, 0], sizes = [4, 1], strides = [1, 1]} : vector<4x2xf32> to vector<4x1xf32>
    %27 = vector.broadcast %26 : vector<4x1xf32> to vector<4x128xf32>
    %28 = arith.mulf %24, %27 : vector<4x128xf32>
    %29 = vector.extract_strided_slice %25 {offsets = [0, 1], sizes = [4, 1], strides = [1, 1]} : vector<4x2xf32> to vector<4x1xf32>
    %30 = vector.broadcast %29 : vector<4x1xf32> to vector<4x128xf32>
    %31 = arith.addf %28, %30 : vector<4x128xf32>
    %cst = arith.constant 0.000000e+00 : f32
    %32 = vector.broadcast %cst : f32 to vector<4x128xf32>
    %33 = arith.maximumf %31, %32 : vector<4x128xf32>
    %c0_5 = arith.constant 0 : index
    %c0_6 = arith.constant 0 : index
    %34 = vector.load %arg4[%c0_5, %c0_6] : memref<8x4xf32, #tpu.memory_space<vmem>>, vector<8x4xf32>
    %35 = vector.extract_strided_slice %33 {offsets = [0, 0], sizes = [1, 128], strides = [1, 1]} : vector<4x128xf32> to vector<1x128xf32>
    %36 = vector.extract_strided_slice %34 {offsets = [0, 0], sizes = [8, 1], strides = [1, 1]} : vector<8x4xf32> to vector<8x1xf32>
    %37 = vector.broadcast %35 : vector<1x128xf32> to vector<8x128xf32>
    %38 = vector.broadcast %36 : vector<8x1xf32> to vector<8x128xf32>
    %39 = arith.mulf %37, %38 : vector<8x128xf32>
    %40 = vector.extract_strided_slice %33 {offsets = [1, 0], sizes = [1, 128], strides = [1, 1]} : vector<4x128xf32> to vector<1x128xf32>
    %41 = vector.extract_strided_slice %34 {offsets = [0, 1], sizes = [8, 1], strides = [1, 1]} : vector<8x4xf32> to vector<8x1xf32>
    %42 = vector.broadcast %40 : vector<1x128xf32> to vector<8x128xf32>
    %43 = vector.broadcast %41 : vector<8x1xf32> to vector<8x128xf32>
    %44 = arith.mulf %42, %43 : vector<8x128xf32>
    %45 = arith.addf %39, %44 : vector<8x128xf32>
    %46 = vector.extract_strided_slice %33 {offsets = [2, 0], sizes = [1, 128], strides = [1, 1]} : vector<4x128xf32> to vector<1x128xf32>
    %47 = vector.extract_strided_slice %34 {offsets = [0, 2], sizes = [8, 1], strides = [1, 1]} : vector<8x4xf32> to vector<8x1xf32>
    %48 = vector.broadcast %46 : vector<1x128xf32> to vector<8x128xf32>
    %49 = vector.broadcast %47 : vector<8x1xf32> to vector<8x128xf32>
    %50 = arith.mulf %48, %49 : vector<8x128xf32>
    %51 = arith.addf %45, %50 : vector<8x128xf32>
    %52 = vector.extract_strided_slice %33 {offsets = [3, 0], sizes = [1, 128], strides = [1, 1]} : vector<4x128xf32> to vector<1x128xf32>
    %53 = vector.extract_strided_slice %34 {offsets = [0, 3], sizes = [8, 1], strides = [1, 1]} : vector<8x4xf32> to vector<8x1xf32>
    %54 = vector.broadcast %52 : vector<1x128xf32> to vector<8x128xf32>
    %55 = vector.broadcast %53 : vector<8x1xf32> to vector<8x128xf32>
    %56 = arith.mulf %54, %55 : vector<8x128xf32>
    %57 = arith.addf %51, %56 : vector<8x128xf32>
    %58 = tpu.iota {dimensions = array<i32: 1>} : vector<1x128xi32>
    %c128_i32 = arith.constant 128 : i32
    %59 = arith.muli %arg0, %c128_i32 : i32
    %60 = vector.broadcast %59 : i32 to vector<1x128xi32>
    %61 = arith.addi %58, %60 : vector<1x128xi32>
    %c72_i32 = arith.constant 72 : i32
    %62 = vector.broadcast %c72_i32 : i32 to vector<1x128xi32>
    %63 = arith.cmpi slt, %61, %62 : vector<1x128xi32>
    %64 = arith.extui %63 : vector<1x128xi1> to vector<1x128xi32>
    %65 = arith.sitofp %64 : vector<1x128xi32> to vector<1x128xf32>
    %66 = vector.broadcast %65 : vector<1x128xf32> to vector<8x128xf32>
    %67 = arith.mulf %57, %66 : vector<8x128xf32>
    %c0_i32 = arith.constant 0 : i32
    %68 = arith.cmpi eq, %arg0, %c0_i32 : i32
    %69 = arith.extui %68 : i1 to i32
    %c0_i32_7 = arith.constant 0 : i32
    %70 = arith.cmpi ne, %69, %c0_i32_7 : i32
    scf.if %70 {
      %cst_18 = arith.constant 0.000000e+00 : f32
      %82 = vector.broadcast %cst_18 : f32 to vector<8x1xf32>
      %c0_19 = arith.constant 0 : index
      %c0_20 = arith.constant 0 : index
      %83 = vector.load %arg5[%c0_19, %c0_20] : memref<8x1xf32, #tpu.memory_space<vmem>>, vector<8x1xf32>
      tpu.vector_store %arg5[%c0_19, %c0_20], %82 {strides = array<i32>} : memref<8x1xf32, #tpu.memory_space<vmem>>, vector<8x1xf32>,
      %cst_21 = arith.constant 0.000000e+00 : f32
      %84 = vector.broadcast %cst_21 : f32 to vector<8x1xf32>
      %c0_22 = arith.constant 0 : index
      %c0_23 = arith.constant 0 : index
      %85 = vector.load %arg6[%c0_22, %c0_23] : memref<8x1xf32, #tpu.memory_space<vmem>>, vector<8x1xf32>
      tpu.vector_store %arg6[%c0_22, %c0_23], %84 {strides = array<i32>} : memref<8x1xf32, #tpu.memory_space<vmem>>, vector<8x1xf32>,
    } else {
    }
    %c0_8 = arith.constant 0 : index
    %c0_9 = arith.constant 0 : index
    %71 = vector.load %arg5[%c0_8, %c0_9] : memref<8x1xf32, #tpu.memory_space<vmem>>, vector<8x1xf32>
    %cst_10 = arith.constant dense<0.000000e+00> : vector<8xf32>
    %72 = vector.multi_reduction <add>, %67, %cst_10 [1] : vector<8x128xf32> to vector<8xf32>
    %73 = vector.shape_cast %72 : vector<8xf32> to vector<8x1xf32>
    %74 = arith.addf %71, %73 : vector<8x1xf32>
    %c0_11 = arith.constant 0 : index
    %c0_12 = arith.constant 0 : index
    %75 = vector.load %arg5[%c0_11, %c0_12] : memref<8x1xf32, #tpu.memory_space<vmem>>, vector<8x1xf32>
    tpu.vector_store %arg5[%c0_11, %c0_12], %74 {strides = array<i32>} : memref<8x1xf32, #tpu.memory_space<vmem>>, vector<8x1xf32>,
    %c0_13 = arith.constant 0 : index
    %c0_14 = arith.constant 0 : index
    %76 = vector.load %arg6[%c0_13, %c0_14] : memref<8x1xf32, #tpu.memory_space<vmem>>, vector<8x1xf32>
    %77 = arith.mulf %67, %67 : vector<8x128xf32>
    %cst_15 = arith.constant dense<0.000000e+00> : vector<8xf32>
    %78 = vector.multi_reduction <add>, %77, %cst_15 [1] : vector<8x128xf32> to vector<8xf32>
    %79 = vector.shape_cast %78 : vector<8xf32> to vector<8x1xf32>
    %80 = arith.addf %76, %79 : vector<8x1xf32>
    %c0_16 = arith.constant 0 : index
    %c0_17 = arith.constant 0 : index
    %81 = vector.load %arg6[%c0_16, %c0_17] : memref<8x1xf32, #tpu.memory_space<vmem>>, vector<8x1xf32>
    tpu.vector_store %arg6[%c0_16, %c0_17], %80 {strides = array<i32>} : memref<8x1xf32, #tpu.memory_space<vmem>>, vector<8x1xf32>,
    return
  }
  func.func @transform_0(%arg0: i32) -> (i32, i32) {
    %c0_i32 = arith.constant 0 : i32
    %c0_i32_0 = arith.constant 0 : i32
    return %c0_i32, %arg0 : i32, i32
  }
  func.func @transform_1(%arg0: i32) -> (i32, i32) {
    %c0_i32 = arith.constant 0 : i32
    %c0_i32_0 = arith.constant 0 : i32
    %c0_i32_1 = arith.constant 0 : i32
    return %c0_i32, %c0_i32_0 : i32, i32
  }
  func.func @transform_2(%arg0: i32) -> (i32, i32) {
    %c0_i32 = arith.constant 0 : i32
    %c0_i32_0 = arith.constant 0 : i32
    %c0_i32_1 = arith.constant 0 : i32
    return %c0_i32, %c0_i32_0 : i32, i32
  }
  func.func @transform_3(%arg0: i32) -> (i32, i32) {
    %c0_i32 = arith.constant 0 : i32
    %c0_i32_0 = arith.constant 0 : i32
    %c0_i32_1 = arith.constant 0 : i32
    return %c0_i32, %c0_i32_0 : i32, i32
  }
  func.func @transform_4(%arg0: i32) -> (i32, i32) {
    %c0_i32 = arith.constant 0 : i32
    %c0_i32_0 = arith.constant 0 : i32
    %c0_i32_1 = arith.constant 0 : i32
    return %c0_i32, %c0_i32_0 : i32, i32
  }
  func.func @transform_5(%arg0: i32) -> (i32, i32) {
    %c0_i32 = arith.constant 0 : i32
    %c0_i32_0 = arith.constant 0 : i32
    %c0_i32_1 = arith.constant 0 : i32
    return %c0_i32, %c0_i32_0 : i32, i32
  }
}

module attributes {stable_mosaic.version = 11 : i64} {
  func.func @_finalize_kernel(%arg0: i32, %arg1: memref<4x128xf32, #tpu.memory_space<vmem>>, %arg2: memref<4x4xf32, #tpu.memory_space<vmem>>, %arg3: memref<4x2xf32, #tpu.memory_space<vmem>>, %arg4: memref<8x4xf32, #tpu.memory_space<vmem>>, %arg5: memref<8x2xf32, #tpu.memory_space<vmem>>, %arg6: memref<8x128xf32, #tpu.memory_space<vmem>>) attributes {dimension_semantics = [#tpu.dimension_semantics<parallel>], iteration_bounds = array<i64: 1>, scalar_prefetch = 0 : i64, scratch_operands = 0 : i64, tpu.core_type = #tpu.core_type<tc>, window_params = [{transform_indices = @transform_0, window_bounds = array<i64: 4, 128>}, {pipeline_mode = #tpu.pipeline_mode<synchronous>, transform_indices = @transform_1, window_bounds = array<i64: 4, 4>}, {pipeline_mode = #tpu.pipeline_mode<synchronous>, transform_indices = @transform_2, window_bounds = array<i64: 4, 2>}, {pipeline_mode = #tpu.pipeline_mode<synchronous>, transform_indices = @transform_3, window_bounds = array<i64: 8, 4>}, {pipeline_mode = #tpu.pipeline_mode<synchronous>, transform_indices = @transform_4, window_bounds = array<i64: 8, 2>}, {transform_indices = @transform_5, window_bounds = array<i64: 8, 128>}]} {
    %c0 = arith.constant 0 : index
    %c0_0 = arith.constant 0 : index
    %0 = vector.load %arg1[%c0, %c0_0] : memref<4x128xf32, #tpu.memory_space<vmem>>, vector<4x128xf32>
    %c0_1 = arith.constant 0 : index
    %c0_2 = arith.constant 0 : index
    %1 = vector.load %arg2[%c0_1, %c0_2] : memref<4x4xf32, #tpu.memory_space<vmem>>, vector<4x4xf32>
    %2 = vector.extract_strided_slice %0 {offsets = [0, 0], sizes = [1, 128], strides = [1, 1]} : vector<4x128xf32> to vector<1x128xf32>
    %3 = vector.extract_strided_slice %1 {offsets = [0, 0], sizes = [4, 1], strides = [1, 1]} : vector<4x4xf32> to vector<4x1xf32>
    %4 = vector.broadcast %2 : vector<1x128xf32> to vector<4x128xf32>
    %5 = vector.broadcast %3 : vector<4x1xf32> to vector<4x128xf32>
    %6 = arith.mulf %4, %5 : vector<4x128xf32>
    %7 = vector.extract_strided_slice %0 {offsets = [1, 0], sizes = [1, 128], strides = [1, 1]} : vector<4x128xf32> to vector<1x128xf32>
    %8 = vector.extract_strided_slice %1 {offsets = [0, 1], sizes = [4, 1], strides = [1, 1]} : vector<4x4xf32> to vector<4x1xf32>
    %9 = vector.broadcast %7 : vector<1x128xf32> to vector<4x128xf32>
    %10 = vector.broadcast %8 : vector<4x1xf32> to vector<4x128xf32>
    %11 = arith.mulf %9, %10 : vector<4x128xf32>
    %12 = arith.addf %6, %11 : vector<4x128xf32>
    %13 = vector.extract_strided_slice %0 {offsets = [2, 0], sizes = [1, 128], strides = [1, 1]} : vector<4x128xf32> to vector<1x128xf32>
    %14 = vector.extract_strided_slice %1 {offsets = [0, 2], sizes = [4, 1], strides = [1, 1]} : vector<4x4xf32> to vector<4x1xf32>
    %15 = vector.broadcast %13 : vector<1x128xf32> to vector<4x128xf32>
    %16 = vector.broadcast %14 : vector<4x1xf32> to vector<4x128xf32>
    %17 = arith.mulf %15, %16 : vector<4x128xf32>
    %18 = arith.addf %12, %17 : vector<4x128xf32>
    %19 = vector.extract_strided_slice %0 {offsets = [3, 0], sizes = [1, 128], strides = [1, 1]} : vector<4x128xf32> to vector<1x128xf32>
    %20 = vector.extract_strided_slice %1 {offsets = [0, 3], sizes = [4, 1], strides = [1, 1]} : vector<4x4xf32> to vector<4x1xf32>
    %21 = vector.broadcast %19 : vector<1x128xf32> to vector<4x128xf32>
    %22 = vector.broadcast %20 : vector<4x1xf32> to vector<4x128xf32>
    %23 = arith.mulf %21, %22 : vector<4x128xf32>
    %24 = arith.addf %18, %23 : vector<4x128xf32>
    %c0_3 = arith.constant 0 : index
    %c0_4 = arith.constant 0 : index
    %25 = vector.load %arg3[%c0_3, %c0_4] : memref<4x2xf32, #tpu.memory_space<vmem>>, vector<4x2xf32>
    %26 = vector.extract_strided_slice %25 {offsets = [0, 0], sizes = [4, 1], strides = [1, 1]} : vector<4x2xf32> to vector<4x1xf32>
    %27 = vector.broadcast %26 : vector<4x1xf32> to vector<4x128xf32>
    %28 = arith.mulf %24, %27 : vector<4x128xf32>
    %29 = vector.extract_strided_slice %25 {offsets = [0, 1], sizes = [4, 1], strides = [1, 1]} : vector<4x2xf32> to vector<4x1xf32>
    %30 = vector.broadcast %29 : vector<4x1xf32> to vector<4x128xf32>
    %31 = arith.addf %28, %30 : vector<4x128xf32>
    %cst = arith.constant 0.000000e+00 : f32
    %32 = vector.broadcast %cst : f32 to vector<4x128xf32>
    %33 = arith.maximumf %31, %32 : vector<4x128xf32>
    %c0_5 = arith.constant 0 : index
    %c0_6 = arith.constant 0 : index
    %34 = vector.load %arg4[%c0_5, %c0_6] : memref<8x4xf32, #tpu.memory_space<vmem>>, vector<8x4xf32>
    %35 = vector.extract_strided_slice %33 {offsets = [0, 0], sizes = [1, 128], strides = [1, 1]} : vector<4x128xf32> to vector<1x128xf32>
    %36 = vector.extract_strided_slice %34 {offsets = [0, 0], sizes = [8, 1], strides = [1, 1]} : vector<8x4xf32> to vector<8x1xf32>
    %37 = vector.broadcast %35 : vector<1x128xf32> to vector<8x128xf32>
    %38 = vector.broadcast %36 : vector<8x1xf32> to vector<8x128xf32>
    %39 = arith.mulf %37, %38 : vector<8x128xf32>
    %40 = vector.extract_strided_slice %33 {offsets = [1, 0], sizes = [1, 128], strides = [1, 1]} : vector<4x128xf32> to vector<1x128xf32>
    %41 = vector.extract_strided_slice %34 {offsets = [0, 1], sizes = [8, 1], strides = [1, 1]} : vector<8x4xf32> to vector<8x1xf32>
    %42 = vector.broadcast %40 : vector<1x128xf32> to vector<8x128xf32>
    %43 = vector.broadcast %41 : vector<8x1xf32> to vector<8x128xf32>
    %44 = arith.mulf %42, %43 : vector<8x128xf32>
    %45 = arith.addf %39, %44 : vector<8x128xf32>
    %46 = vector.extract_strided_slice %33 {offsets = [2, 0], sizes = [1, 128], strides = [1, 1]} : vector<4x128xf32> to vector<1x128xf32>
    %47 = vector.extract_strided_slice %34 {offsets = [0, 2], sizes = [8, 1], strides = [1, 1]} : vector<8x4xf32> to vector<8x1xf32>
    %48 = vector.broadcast %46 : vector<1x128xf32> to vector<8x128xf32>
    %49 = vector.broadcast %47 : vector<8x1xf32> to vector<8x128xf32>
    %50 = arith.mulf %48, %49 : vector<8x128xf32>
    %51 = arith.addf %45, %50 : vector<8x128xf32>
    %52 = vector.extract_strided_slice %33 {offsets = [3, 0], sizes = [1, 128], strides = [1, 1]} : vector<4x128xf32> to vector<1x128xf32>
    %53 = vector.extract_strided_slice %34 {offsets = [0, 3], sizes = [8, 1], strides = [1, 1]} : vector<8x4xf32> to vector<8x1xf32>
    %54 = vector.broadcast %52 : vector<1x128xf32> to vector<8x128xf32>
    %55 = vector.broadcast %53 : vector<8x1xf32> to vector<8x128xf32>
    %56 = arith.mulf %54, %55 : vector<8x128xf32>
    %57 = arith.addf %51, %56 : vector<8x128xf32>
    %c0_7 = arith.constant 0 : index
    %c0_8 = arith.constant 0 : index
    %58 = vector.load %arg5[%c0_7, %c0_8] : memref<8x2xf32, #tpu.memory_space<vmem>>, vector<8x2xf32>
    %59 = vector.extract_strided_slice %58 {offsets = [0, 0], sizes = [8, 1], strides = [1, 1]} : vector<8x2xf32> to vector<8x1xf32>
    %60 = vector.broadcast %59 : vector<8x1xf32> to vector<8x128xf32>
    %61 = arith.mulf %57, %60 : vector<8x128xf32>
    %62 = vector.extract_strided_slice %58 {offsets = [0, 1], sizes = [8, 1], strides = [1, 1]} : vector<8x2xf32> to vector<8x1xf32>
    %63 = vector.broadcast %62 : vector<8x1xf32> to vector<8x128xf32>
    %64 = arith.addf %61, %63 : vector<8x128xf32>
    %cst_9 = arith.constant 0.000000e+00 : f32
    %65 = vector.broadcast %cst_9 : f32 to vector<8x128xf32>
    %66 = arith.maximumf %64, %65 : vector<8x128xf32>
    %c0_10 = arith.constant 0 : index
    %c0_11 = arith.constant 0 : index
    %67 = vector.load %arg6[%c0_10, %c0_11] : memref<8x128xf32, #tpu.memory_space<vmem>>, vector<8x128xf32>
    tpu.vector_store %arg6[%c0_10, %c0_11], %66 {strides = array<i32>} : memref<8x128xf32, #tpu.memory_space<vmem>>, vector<8x128xf32>,
    return
  }
  func.func @transform_0(%arg0: i32) -> (i32, i32) {
    %c0_i32 = arith.constant 0 : i32
    %c0_i32_0 = arith.constant 0 : i32
    return %c0_i32, %arg0 : i32, i32
  }
  func.func @transform_1(%arg0: i32) -> (i32, i32) {
    %c0_i32 = arith.constant 0 : i32
    %c0_i32_0 = arith.constant 0 : i32
    %c0_i32_1 = arith.constant 0 : i32
    return %c0_i32, %c0_i32_0 : i32, i32
  }
  func.func @transform_2(%arg0: i32) -> (i32, i32) {
    %c0_i32 = arith.constant 0 : i32
    %c0_i32_0 = arith.constant 0 : i32
    %c0_i32_1 = arith.constant 0 : i32
    return %c0_i32, %c0_i32_0 : i32, i32
  }
  func.func @transform_3(%arg0: i32) -> (i32, i32) {
    %c0_i32 = arith.constant 0 : i32
    %c0_i32_0 = arith.constant 0 : i32
    %c0_i32_1 = arith.constant 0 : i32
    return %c0_i32, %c0_i32_0 : i32, i32
  }
  func.func @transform_4(%arg0: i32) -> (i32, i32) {
    %c0_i32 = arith.constant 0 : i32
    %c0_i32_0 = arith.constant 0 : i32
    %c0_i32_1 = arith.constant 0 : i32
    return %c0_i32, %c0_i32_0 : i32, i32
  }
  func.func @transform_5(%arg0: i32) -> (i32, i32) {
    %c0_i32 = arith.constant 0 : i32
    %c0_i32_0 = arith.constant 0 : i32
    return %c0_i32, %arg0 : i32, i32
  }
}

</mosaic_0001>

<llo_original>
// kernel: trans_decoupling_block2_forward.3
$region0: #{trans_decoupling_block2_forward.3}
  #allocation0 [shape = 'u32[]', space=smem, size = 0x4, offset = 0x4, fixed_abs, tag = 'smem constant byte address 0x4 - core index']
  #allocation1 [shape = 'u32[72,128]{1,0:T(1,128)}', space=vmem, size = 0x9000, scoped, tag = 'internal scratch']
  %s0 = inlined_call_operand.vmem [shape: f32[4,128], index: 0, kind: input, shape index: {}]
  %s1 = inlined_call_operand.vmem [shape: f32[4,4], index: 1, kind: input, shape index: {}]
  %s2 = inlined_call_operand.vmem [shape: f32[4,1], index: 2, kind: output, shape index: {0}]
  %s3 = inlined_call_operand.vmem [shape: f32[4,1], index: 3, kind: output, shape index: {1}]
  %4 = xla_tuple %s2, %s3
  %s5 = sld [smem:[#allocation0]]
  $region30: #{trans_decoupling_block2_forward.3} parent=0
    _
  %s7 = ssub.s32 1, %s5
  %s8 = scalar_select 0, %s7, %s5
  // Predicated region
  $region2: #{trans_decoupling_block2_forward.3} parent=0 // pred_check
    _
  $region3: #{trans_decoupling_block2_forward.3} parent=0 // pred_check_branch
    %10 = sbr.rel (0) target = $region5
  $region4: #{trans_decoupling_block2_forward.3} parent=0 // pred_region
    _
  $region5: #{trans_decoupling_block2_forward.3} parent=0 // pred_fallthru
    _
  // Predicated region
  $region6: #{trans_decoupling_block2_forward.3} parent=0 // pred_check
    _
  $region7: #{trans_decoupling_block2_forward.3} parent=0 // pred_check_branch
    %12 = sbr.rel (0) target = $region9
  $region8: #{trans_decoupling_block2_forward.3} parent=0 // pred_region
    _
  $region9: #{trans_decoupling_block2_forward.3} parent=0 // pred_fallthru
    _
  %v13 = vld [vmem:[%s0] sm:$0xf]
  %v14 = vld [vmem:[%s1] sm:$0xf]
  %v15 = vperm.slane %v13, 0
  %17 = vset.pattern.permute.xlu0 0
  %18 = vperm.xlu0 %17, %v14
  %v19 = vpop.permute.xlu0 %18
  %v21 = vmul.f32 %v15, %v19
  %v22 = vperm.slane %v13, 1
  %23 = vset.pattern.permute.xlu0 1
  %24 = vperm.xlu0 %23, %v14
  %v25 = vpop.permute.xlu0 %24
  %v27 = vmul.f32 %v22, %v25
  %v28 = vadd.f32 %v21, %v27
  %v29 = vperm.slane %v13, 2
  %30 = vset.pattern.permute.xlu0 2
  %31 = vperm.xlu0 %30, %v14
  %v32 = vpop.permute.xlu0 %31
  %v34 = vmul.f32 %v29, %v32
  %v35 = vadd.f32 %v28, %v34
  %v36 = vperm.slane %v13, 3
  %37 = vset.pattern.permute.xlu0 3
  %38 = vperm.xlu0 %37, %v14
  %v39 = vpop.permute.xlu0 %38
  %v41 = vmul.f32 %v36, %v39
  %v42 = vadd.f32 %v35, %v41
  %v43 = vlaneseq
  %v44 = vand.u32 %v43, 127
  %s45 = smul.u32 0, 128
  %v46 = vstv %s45
  %v47 = vadd.s32 %v44, %v46
  %vm48 = vcmp.lt.s32.totalorder %v47, 128
  %v49 = vsel %vm48, 1, 0
  %v50 = vcvt.s32.f32 %v49
  %v51 = vmul.f32 %v42, %v50
  %p52 = scmp.eq.s32.totalorder 0, 0
  // Predicated region
  $region10: #{trans_decoupling_block2_forward.3} parent=0 // pred_check
    %p53 = pneg %p52
  $region11: #{trans_decoupling_block2_forward.3} parent=0 // pred_check_branch
    %55 = sbr.rel (%p53) target = $region13
  $region12: #{trans_decoupling_block2_forward.3} parent=0 // pred_region
    %vm56 = vcmask 3072
    %57 = vst.msk [vmem:[%s2] sm:$0xf] %vm56, 0.0
    %58 = vst.msk [vmem:[%s3] sm:$0xf] %vm56, 0.0
  $region13: #{trans_decoupling_block2_forward.3} parent=0 // pred_fallthru
    _
  %v59 = vld [vmem:[%s2] sm:$0xf]
  %vm60 = vcmask 1043456
  %v61 = vsel %vm60, %v51, 0.0
  %62 = vadd.xlane.f32.xlu0 %v61
  %v63 = vpop.xlane.xlu0 %62
  %v64 = vadd.f32 %v59, %v63
  %vm65 = vcmask 3072
  %66 = vst.msk [vmem:[%s2] sm:$0xf] %vm65, %v64
  %v67 = vld [vmem:[%s3] sm:$0xf]
  %v68 = vmul.f32 %v51, %v51
  %v69 = vsel %vm60, %v68, 0.0
  %70 = vadd.xlane.f32.xlu0 %v69
  %v71 = vpop.xlane.xlu0 %70
  %v72 = vadd.f32 %v67, %v71
  %73 = vst.msk [vmem:[%s3] sm:$0xf] %vm65, %v72
  // Predicated region
  $region14: #{trans_decoupling_block2_forward.3} parent=0 // pred_check
    _
  $region15: #{trans_decoupling_block2_forward.3} parent=0 // pred_check_branch
    %75 = sbr.rel (0) target = $region17
  $region16: #{trans_decoupling_block2_forward.3} parent=0 // pred_region
    _
  $region17: #{trans_decoupling_block2_forward.3} parent=0 // pred_fallthru
    _
  // Predicated region
  $region18: #{trans_decoupling_block2_forward.3} parent=0 // pred_check
    _
  $region19: #{trans_decoupling_block2_forward.3} parent=0 // pred_check_branch
    %77 = sbr.rel (0) target = $region21
  $region20: #{trans_decoupling_block2_forward.3} parent=0 // pred_region
    _
  $region21: #{trans_decoupling_block2_forward.3} parent=0 // pred_fallthru
    _
  // Predicated region
  $region22: #{trans_decoupling_block2_forward.3} parent=0 // pred_check
    _
  $region23: #{trans_decoupling_block2_forward.3} parent=0 // pred_check_branch
    %79 = sbr.rel (0) target = $region25
  $region24: #{trans_decoupling_block2_forward.3} parent=0 // pred_region
    _
  $region25: #{trans_decoupling_block2_forward.3} parent=0 // pred_fallthru
    _
  // Predicated region
  $region26: #{trans_decoupling_block2_forward.3} parent=0 // pred_check
    _
  $region27: #{trans_decoupling_block2_forward.3} parent=0 // pred_check_branch
    %81 = sbr.rel (0) target = $region29
  $region28: #{trans_decoupling_block2_forward.3} parent=0 // pred_region
    _
  $region29: #{trans_decoupling_block2_forward.3} parent=0 // pred_fallthru
    _

// kernel: trans_decoupling_block2_forward.4
$region0: #{trans_decoupling_block2_forward.4}
  #allocation0 [shape = 'u32[]', space=smem, size = 0x4, offset = 0x4, fixed_abs, tag = 'smem constant byte address 0x4 - core index']
  #allocation1 [shape = 'u32[72,128]{1,0:T(1,128)}', space=vmem, size = 0x9000, scoped, tag = 'internal scratch']
  %s0 = inlined_call_operand.vmem [shape: f32[4,128], index: 0, kind: input, shape index: {}]
  %s1 = inlined_call_operand.vmem [shape: f32[4,4], index: 1, kind: input, shape index: {}]
  %s2 = inlined_call_operand.vmem [shape: f32[4,2], index: 2, kind: input, shape index: {}]
  %s3 = inlined_call_operand.vmem [shape: f32[8,4], index: 3, kind: input, shape index: {}]
  %s4 = inlined_call_operand.vmem [shape: f32[8,1], index: 4, kind: output, shape index: {0}]
  %s5 = inlined_call_operand.vmem [shape: f32[8,1], index: 5, kind: output, shape index: {1}]
  %6 = xla_tuple %s4, %s5
  %s7 = sld [smem:[#allocation0]]
  $region38: #{trans_decoupling_block2_forward.4} parent=0
    _
  %s9 = ssub.s32 1, %s7
  %s10 = scalar_select 0, %s9, %s7
  // Predicated region
  $region2: #{trans_decoupling_block2_forward.4} parent=0 // pred_check
    _
  $region3: #{trans_decoupling_block2_forward.4} parent=0 // pred_check_branch
    %12 = sbr.rel (0) target = $region5
  $region4: #{trans_decoupling_block2_forward.4} parent=0 // pred_region
    _
  $region5: #{trans_decoupling_block2_forward.4} parent=0 // pred_fallthru
    _
  // Predicated region
  $region6: #{trans_decoupling_block2_forward.4} parent=0 // pred_check
    _
  $region7: #{trans_decoupling_block2_forward.4} parent=0 // pred_check_branch
    %14 = sbr.rel (0) target = $region9
  $region8: #{trans_decoupling_block2_forward.4} parent=0 // pred_region
    _
  $region9: #{trans_decoupling_block2_forward.4} parent=0 // pred_fallthru
    _
  // Predicated region
  $region10: #{trans_decoupling_block2_forward.4} parent=0 // pred_check
    _
  $region11: #{trans_decoupling_block2_forward.4} parent=0 // pred_check_branch
    %16 = sbr.rel (0) target = $region13
  $region12: #{trans_decoupling_block2_forward.4} parent=0 // pred_region
    _
  $region13: #{trans_decoupling_block2_forward.4} parent=0 // pred_fallthru
    _
  // Predicated region
  $region14: #{trans_decoupling_block2_forward.4} parent=0 // pred_check
    _
  $region15: #{trans_decoupling_block2_forward.4} parent=0 // pred_check_branch
    %18 = sbr.rel (0) target = $region17
  $region16: #{trans_decoupling_block2_forward.4} parent=0 // pred_region
    _
  $region17: #{trans_decoupling_block2_forward.4} parent=0 // pred_fallthru
    _
  %v19 = vld [vmem:[%s0] sm:$0xf]
  %v20 = vld [vmem:[%s1] sm:$0xf]
  %v21 = vperm.slane %v19, 0
  %23 = vset.pattern.permute.xlu0 0
  %24 = vperm.xlu0 %23, %v20
  %v25 = vpop.permute.xlu0 %24
  %v27 = vmul.f32 %v21, %v25
  %v28 = vperm.slane %v19, 1
  %29 = vset.pattern.permute.xlu0 1
  %30 = vperm.xlu0 %29, %v20
  %v31 = vpop.permute.xlu0 %30
  %v33 = vmul.f32 %v28, %v31
  %v34 = vadd.f32 %v27, %v33
  %v35 = vperm.slane %v19, 2
  %36 = vset.pattern.permute.xlu0 2
  %37 = vperm.xlu0 %36, %v20
  %v38 = vpop.permute.xlu0 %37
  %v40 = vmul.f32 %v35, %v38
  %v41 = vadd.f32 %v34, %v40
  %v42 = vperm.slane %v19, 3
  %43 = vset.pattern.permute.xlu0 3
  %44 = vperm.xlu0 %43, %v20
  %v45 = vpop.permute.xlu0 %44
  %v47 = vmul.f32 %v42, %v45
  %v48 = vadd.f32 %v41, %v47
  %v49 = vld [vmem:[%s2] sm:$0xf]
  %51 = vset.pattern.permute.xlu0 0
  %52 = vperm.xlu0 %51, %v49
  %v53 = vpop.permute.xlu0 %52
  %v55 = vmul.f32 %v48, %v53
  %56 = vset.pattern.permute.xlu0 1
  %57 = vperm.xlu0 %56, %v49
  %v58 = vpop.permute.xlu0 %57
  %v60 = vadd.f32 %v55, %v58
  %v61 = vmax.f32 %v60, 0.0
  %v62 = vld [vmem:[%s3] sm:$0xff]
  %v63 = vperm.slane %v61, 0
  %65 = vset.pattern.permute.xlu0 0
  %66 = vperm.xlu0 %65, %v62
  %v67 = vpop.permute.xlu0 %66
  %v69 = vmul.f32 %v63, %v67
  %v70 = vperm.slane %v61, 1
  %71 = vset.pattern.permute.xlu0 1
  %72 = vperm.xlu0 %71, %v62
  %v73 = vpop.permute.xlu0 %72
  %v75 = vmul.f32 %v70, %v73
  %v76 = vadd.f32 %v69, %v75
  %v77 = vperm.slane %v61, 2
  %78 = vset.pattern.permute.xlu0 2
  %79 = vperm.xlu0 %78, %v62
  %v80 = vpop.permute.xlu0 %79
  %v82 = vmul.f32 %v77, %v80
  %v83 = vadd.f32 %v76, %v82
  %v84 = vperm.slane %v61, 3
  %85 = vset.pattern.permute.xlu0 3
  %86 = vperm.xlu0 %85, %v62
  %v87 = vpop.permute.xlu0 %86
  %v89 = vmul.f32 %v84, %v87
  %v90 = vadd.f32 %v83, %v89
  %v91 = vlaneseq
  %v92 = vand.u32 %v91, 127
  %s93 = smul.u32 0, 128
  %v94 = vstv %s93
  %v95 = vadd.s32 %v92, %v94
  %vm96 = vcmp.lt.s32.totalorder %v95, 72
  %v97 = vsel %vm96, 1, 0
  %v98 = vcvt.s32.f32 %v97
  %v99 = vmul.f32 %v90, %v98
  %p100 = scmp.eq.s32.totalorder 0, 0
  // Predicated region
  $region18: #{trans_decoupling_block2_forward.4} parent=0 // pred_check
    %p101 = pneg %p100
  $region19: #{trans_decoupling_block2_forward.4} parent=0 // pred_check_branch
    %103 = sbr.rel (%p101) target = $region21
  $region20: #{trans_decoupling_block2_forward.4} parent=0 // pred_region
    %vm104 = vcmask 7168
    %105 = vst.msk [vmem:[%s4] sm:$0xff] %vm104, 0.0
    %106 = vst.msk [vmem:[%s5] sm:$0xff] %vm104, 0.0
  $region21: #{trans_decoupling_block2_forward.4} parent=0 // pred_fallthru
    _
  %v107 = vld [vmem:[%s4] sm:$0xff]
  %108 = vadd.xlane.f32.xlu0 %v99
  %v109 = vpop.xlane.xlu0 %108
  %v110 = vadd.f32 %v107, %v109
  %vm111 = vcmask 7168
  %112 = vst.msk [vmem:[%s4] sm:$0xff] %vm111, %v110
  %v113 = vld [vmem:[%s5] sm:$0xff]
  %v114 = vmul.f32 %v99, %v99
  %115 = vadd.xlane.f32.xlu0 %v114
  %v116 = vpop.xlane.xlu0 %115
  %v117 = vadd.f32 %v113, %v116
  %118 = vst.msk [vmem:[%s5] sm:$0xff] %vm111, %v117
  // Predicated region
  $region22: #{trans_decoupling_block2_forward.4} parent=0 // pred_check
    _
  $region23: #{trans_decoupling_block2_forward.4} parent=0 // pred_check_branch
    %120 = sbr.rel (0) target = $region25
  $region24: #{trans_decoupling_block2_forward.4} parent=0 // pred_region
    _
  $region25: #{trans_decoupling_block2_forward.4} parent=0 // pred_fallthru
    _
  // Predicated region
  $region26: #{trans_decoupling_block2_forward.4} parent=0 // pred_check
    _
  $region27: #{trans_decoupling_block2_forward.4} parent=0 // pred_check_branch
    %122 = sbr.rel (0) target = $region29
  $region28: #{trans_decoupling_block2_forward.4} parent=0 // pred_region
    _
  $region29: #{trans_decoupling_block2_forward.4} parent=0 // pred_fallthru
    _
  // Predicated region
  $region30: #{trans_decoupling_block2_forward.4} parent=0 // pred_check
    _
  $region31: #{trans_decoupling_block2_forward.4} parent=0 // pred_check_branch
    %124 = sbr.rel (0) target = $region33
  $region32: #{trans_decoupling_block2_forward.4} parent=0 // pred_region
    _
  $region33: #{trans_decoupling_block2_forward.4} parent=0 // pred_fallthru
    _
  // Predicated region
  $region34: #{trans_decoupling_block2_forward.4} parent=0 // pred_check
    _
  $region35: #{trans_decoupling_block2_forward.4} parent=0 // pred_check_branch
    %126 = sbr.rel (0) target = $region37
  $region36: #{trans_decoupling_block2_forward.4} parent=0 // pred_region
    _
  $region37: #{trans_decoupling_block2_forward.4} parent=0 // pred_fallthru
    _

// kernel: trans_decoupling_block2_forward.5
$region0: #{trans_decoupling_block2_forward.5}
  #allocation0 [shape = 'u32[]', space=smem, size = 0x4, offset = 0x4, fixed_abs, tag = 'smem constant byte address 0x4 - core index']
  #allocation1 [shape = 'u32[72,128]{1,0:T(1,128)}', space=vmem, size = 0x9000, scoped, tag = 'internal scratch']
  %s0 = inlined_call_operand.vmem [shape: f32[4,128], index: 0, kind: input, shape index: {}]
  %s1 = inlined_call_operand.vmem [shape: f32[4,4], index: 1, kind: input, shape index: {}]
  %s2 = inlined_call_operand.vmem [shape: f32[4,2], index: 2, kind: input, shape index: {}]
  %s3 = inlined_call_operand.vmem [shape: f32[8,4], index: 3, kind: input, shape index: {}]
  %s4 = inlined_call_operand.vmem [shape: f32[8,2], index: 4, kind: input, shape index: {}]
  %s5 = inlined_call_operand.vmem [shape: f32[8,128], index: 5, kind: output, shape index: {}]
  %s6 = sld [smem:[#allocation0]]
  $region30: #{trans_decoupling_block2_forward.5} parent=0
    _
  %s8 = ssub.s32 1, %s6
  %s9 = scalar_select 0, %s8, %s6
  // Predicated region
  $region2: #{trans_decoupling_block2_forward.5} parent=0 // pred_check
    _
  $region3: #{trans_decoupling_block2_forward.5} parent=0 // pred_check_branch
    %11 = sbr.rel (0) target = $region5
  $region4: #{trans_decoupling_block2_forward.5} parent=0 // pred_region
    _
  $region5: #{trans_decoupling_block2_forward.5} parent=0 // pred_fallthru
    _
  // Predicated region
  $region6: #{trans_decoupling_block2_forward.5} parent=0 // pred_check
    _
  $region7: #{trans_decoupling_block2_forward.5} parent=0 // pred_check_branch
    %13 = sbr.rel (0) target = $region9
  $region8: #{trans_decoupling_block2_forward.5} parent=0 // pred_region
    _
  $region9: #{trans_decoupling_block2_forward.5} parent=0 // pred_fallthru
    _
  // Predicated region
  $region10: #{trans_decoupling_block2_forward.5} parent=0 // pred_check
    _
  $region11: #{trans_decoupling_block2_forward.5} parent=0 // pred_check_branch
    %15 = sbr.rel (0) target = $region13
  $region12: #{trans_decoupling_block2_forward.5} parent=0 // pred_region
    _
  $region13: #{trans_decoupling_block2_forward.5} parent=0 // pred_fallthru
    _
  // Predicated region
  $region14: #{trans_decoupling_block2_forward.5} parent=0 // pred_check
    _
  $region15: #{trans_decoupling_block2_forward.5} parent=0 // pred_check_branch
    %17 = sbr.rel (0) target = $region17
  $region16: #{trans_decoupling_block2_forward.5} parent=0 // pred_region
    _
  $region17: #{trans_decoupling_block2_forward.5} parent=0 // pred_fallthru
    _
  // Predicated region
  $region18: #{trans_decoupling_block2_forward.5} parent=0 // pred_check
    _
  $region19: #{trans_decoupling_block2_forward.5} parent=0 // pred_check_branch
    %19 = sbr.rel (0) target = $region21
  $region20: #{trans_decoupling_block2_forward.5} parent=0 // pred_region
    _
  $region21: #{trans_decoupling_block2_forward.5} parent=0 // pred_fallthru
    _
  %v20 = vld [vmem:[%s0] sm:$0xf]
  %v21 = vld [vmem:[%s1] sm:$0xf]
  %v22 = vperm.slane %v20, 0
  %24 = vset.pattern.permute.xlu0 0
  %25 = vperm.xlu0 %24, %v21
  %v26 = vpop.permute.xlu0 %25
  %v28 = vmul.f32 %v22, %v26
  %v29 = vperm.slane %v20, 1
  %30 = vset.pattern.permute.xlu0 1
  %31 = vperm.xlu0 %30, %v21
  %v32 = vpop.permute.xlu0 %31
  %v34 = vmul.f32 %v29, %v32
  %v35 = vadd.f32 %v28, %v34
  %v36 = vperm.slane %v20, 2
  %37 = vset.pattern.permute.xlu0 2
  %38 = vperm.xlu0 %37, %v21
  %v39 = vpop.permute.xlu0 %38
  %v41 = vmul.f32 %v36, %v39
  %v42 = vadd.f32 %v35, %v41
  %v43 = vperm.slane %v20, 3
  %44 = vset.pattern.permute.xlu0 3
  %45 = vperm.xlu0 %44, %v21
  %v46 = vpop.permute.xlu0 %45
  %v48 = vmul.f32 %v43, %v46
  %v49 = vadd.f32 %v42, %v48
  %v50 = vld [vmem:[%s2] sm:$0xf]
  %52 = vset.pattern.permute.xlu0 0
  %53 = vperm.xlu0 %52, %v50
  %v54 = vpop.permute.xlu0 %53
  %v56 = vmul.f32 %v49, %v54
  %57 = vset.pattern.permute.xlu0 1
  %58 = vperm.xlu0 %57, %v50
  %v59 = vpop.permute.xlu0 %58
  %v61 = vadd.f32 %v56, %v59
  %v62 = vmax.f32 %v61, 0.0
  %v63 = vld [vmem:[%s3] sm:$0xff]
  %v64 = vperm.slane %v62, 0
  %66 = vset.pattern.permute.xlu0 0
  %67 = vperm.xlu0 %66, %v63
  %v68 = vpop.permute.xlu0 %67
  %v70 = vmul.f32 %v64, %v68
  %v71 = vperm.slane %v62, 1
  %72 = vset.pattern.permute.xlu0 1
  %73 = vperm.xlu0 %72, %v63
  %v74 = vpop.permute.xlu0 %73
  %v76 = vmul.f32 %v71, %v74
  %v77 = vadd.f32 %v70, %v76
  %v78 = vperm.slane %v62, 2
  %79 = vset.pattern.permute.xlu0 2
  %80 = vperm.xlu0 %79, %v63
  %v81 = vpop.permute.xlu0 %80
  %v83 = vmul.f32 %v78, %v81
  %v84 = vadd.f32 %v77, %v83
  %v85 = vperm.slane %v62, 3
  %86 = vset.pattern.permute.xlu0 3
  %87 = vperm.xlu0 %86, %v63
  %v88 = vpop.permute.xlu0 %87
  %v90 = vmul.f32 %v85, %v88
  %v91 = vadd.f32 %v84, %v90
  %v92 = vld [vmem:[%s4] sm:$0xff]
  %94 = vset.pattern.permute.xlu0 0
  %95 = vperm.xlu0 %94, %v92
  %v96 = vpop.permute.xlu0 %95
  %v98 = vmul.f32 %v91, %v96
  %99 = vset.pattern.permute.xlu0 1
  %100 = vperm.xlu0 %99, %v92
  %v101 = vpop.permute.xlu0 %100
  %v103 = vadd.f32 %v98, %v101
  %v104 = vmax.f32 %v103, 0.0
  %105 = vst [vmem:[%s5] sm:$0xff] %v104
  // Predicated region
  $region22: #{trans_decoupling_block2_forward.5} parent=0 // pred_check
    _
  $region23: #{trans_decoupling_block2_forward.5} parent=0 // pred_check_branch
    %107 = sbr.rel (0) target = $region25
  $region24: #{trans_decoupling_block2_forward.5} parent=0 // pred_region
    _
  $region25: #{trans_decoupling_block2_forward.5} parent=0 // pred_fallthru
    _
  // Predicated region
  $region26: #{trans_decoupling_block2_forward.5} parent=0 // pred_check
    _
  $region27: #{trans_decoupling_block2_forward.5} parent=0 // pred_check_branch
    %109 = sbr.rel (0) target = $region29
  $region28: #{trans_decoupling_block2_forward.5} parent=0 // pred_region
    _
  $region29: #{trans_decoupling_block2_forward.5} parent=0 // pred_fallthru
    _

</llo_original>
